<compile_context>
chip_gen: v6e
topology: v6e:2x2x1
jax: 0.10.0
libtpu: 0.0.40
codegen_flags: <defaults>
</compile_context>

<pallas_src>
import jax
import jax.numpy as jnp
from jax import lax
from jax.experimental import pallas as pl
from jax.experimental.pallas import tpu as pltpu

HIDDEN = 128
N_MEAN_HEADS = 3       # red_mean, green_mean, blue_mean
HEAD_PAD = 8           # pad the 3 mean heads to 8 rows / 8 output lanes

# Packed parameter buffer row layout.
ROW_W2T_START = 0
ROW_W1 = 128
ROW_B1 = 129
ROW_B2 = 130
ROW_WH_START = 131
ROW_BH = 139
N_ROWS = 140


def _policy_kernel(inp_ref, p_ref, out_ref):
    # inp_ref : SMEM (1, 1)     scalar randn input
    # p_ref   : VMEM (140, 128) packed parameters
    # out_ref : VMEM (1, 8)     lanes 0..2 = red/green/blue means, lanes 3..7 = 0
    x = inp_ref[0, 0]                                                    # scalar (SMEM)

    w1 = p_ref[ROW_W1:ROW_W1 + 1, :]                                     # (1, 128)
    b1 = p_ref[ROW_B1:ROW_B1 + 1, :]                                     # (1, 128)
    b2 = p_ref[ROW_B2:ROW_B2 + 1, :]                                     # (1, 128)

    # L1: Linear(1, 128) of a scalar is a broadcast scale + bias (VPU only).
    h1 = jnp.maximum(x * w1 + b1, 0.0)                                   # (1, 128)

    # L2: (1,128) @ (128,128) on the MXU, then bias + ReLU.
    h2 = jnp.dot(h1, p_ref[ROW_W2T_START:ROW_W2T_START + HIDDEN, :],
                 preferred_element_type=jnp.float32)
    h2 = jnp.maximum(h2 + b2, 0.0)                                       # (1, 128)

    # Fused mean heads: contract h2 against the (8,128) head rows (trans_b).
    wh = p_ref[ROW_WH_START:ROW_WH_START + HEAD_PAD, :]                  # (8, 128)
    heads = lax.dot_general(h2, wh, (((1,), (1,)), ((), ())),
                            preferred_element_type=jnp.float32)          # (1, 8)
    bh = p_ref[ROW_BH:ROW_BH + 1, 0:HEAD_PAD]                            # (1, 8)
    out_ref[...] = heads + bh


@jax.jit
def policy_forward(inp, packed):
    """inp: (1,) float32 (the torch.randn(1) input).  Returns the 6 outputs."""
    out = pl.pallas_call(
        _policy_kernel,
        out_shape=jax.ShapeDtypeStruct((1, HEAD_PAD), jnp.float32),
        in_specs=[
            pl.BlockSpec(memory_space=pltpu.MemorySpace.SMEM),   # scalar input
            pl.BlockSpec(memory_space=pltpu.MemorySpace.VMEM),   # packed params
        ],
        out_specs=pl.BlockSpec(memory_space=pltpu.MemorySpace.VMEM),
    )(inp.reshape(1, 1).astype(jnp.float32), packed)

    means = out[0, :N_MEAN_HEADS]                 # single slice outside the hot path
    zero = jnp.zeros((1,), jnp.float32)           # torch.clamp(x, 0, 0) == 0 identically
    return (means[0:1], zero, means[1:2], zero, means[2:3], zero)


def init_params(key):
    """Deterministic init mimicking nn.Linear's U(-1/sqrt(fan_in), 1/sqrt(fan_in))."""
    ks = jax.random.split(key, 16)

    def lin(kw, kb, fan_in, fan_out):
        bound = 1.0 / jnp.sqrt(jnp.float32(fan_in))
        w = jax.random.uniform(kw, (fan_out, fan_in), jnp.float32, -bound, bound)
        b = jax.random.uniform(kb, (fan_out,), jnp.float32, -bound, bound)
        return w, b

    w1, b1 = lin(ks[0], ks[1], 1, HIDDEN)            # (128, 1), (128,)
    w2, b2 = lin(ks[2], ks[3], HIDDEN, HIDDEN)       # (128, 128), (128,)

    head_ws, head_bs = [], []
    for i in range(6):                               # red_m, red_ls, green_m, green_ls, blue_m, blue_ls
        w, b = lin(ks[4 + 2 * i], ks[5 + 2 * i], HIDDEN, 1)
        head_ws.append(w)                            # (1, 128)
        head_bs.append(b)                            # (1,)

    # Single packed f32 parameter slab for the kernel (one DMA).
    packed = jnp.zeros((N_ROWS, HIDDEN), jnp.float32)
    packed = packed.at[ROW_W2T_START:ROW_W2T_START + HIDDEN].set(w2.T)
    packed = packed.at[ROW_W1].set(w1[:, 0])
    packed = packed.at[ROW_B1].set(b1)
    packed = packed.at[ROW_B2].set(b2)
    mean_w = jnp.concatenate([head_ws[0], head_ws[2], head_ws[4]], axis=0)   # (3, 128)
    mean_b = jnp.concatenate([head_bs[0], head_bs[2], head_bs[4]])           # (3,)
    packed = packed.at[ROW_WH_START:ROW_WH_START + N_MEAN_HEADS].set(mean_w)
    packed = packed.at[ROW_BH, :N_MEAN_HEADS].set(mean_b)

    raw = (w1, b1, w2, b2, head_ws, head_bs)
    return packed, raw


def reference_forward(inp, raw):
    """Pure-JAX reference matching the PyTorch forward exactly."""
    w1, b1, w2, b2, head_ws, head_bs = raw
    hp = lax.Precision.HIGHEST
    x = jnp.maximum(jnp.dot(w1, inp, precision=hp) + b1, 0.0)    # (128,)
    x = jnp.maximum(jnp.dot(w2, x, precision=hp) + b2, 0.0)      # (128,)
    outs = []
    for i in range(6):
        y = jnp.dot(head_ws[i], x, precision=hp) + head_bs[i]    # (1,)
        if i % 2 == 1:                                           # log_std -> clamp(·, 0, 0)
            y = jnp.clip(y, 0.0, 0.0)
        outs.append(y)
    return tuple(outs)


if __name__ == "__main__":
    key = jax.random.PRNGKey(0)
    k_params, k_input = jax.random.split(key)

    packed, raw = init_params(k_params)
    inp = jax.random.normal(k_input, (1,), jnp.float32)   # torch.randn(1)

    outs = policy_forward(inp, packed)
    outs = jax.block_until_ready(outs)

    refs = reference_forward(inp, raw)
    for o, r in zip(outs, refs):
        assert o.shape == (1,)
        assert jnp.allclose(o, r, atol=1e-4, rtol=1e-4), (o, r)

    # TODO(synk): Policy.sample() (Normal sampling / log_prob) is outside forward() and not kernelized.
    print("KERNEL_OK")
</pallas_src>

<mosaic_0001>
module attributes {stable_mosaic.version = 11 : i64} {
  func.func @_policy_kernel(%arg0: memref<1x1xf32, #tpu.memory_space<smem>>, %arg1: memref<140x128xf32, #tpu.memory_space<vmem>>, %arg2: memref<1x8xf32, #tpu.memory_space<vmem>>) attributes {dimension_semantics = [], scalar_prefetch = 0 : i64, scratch_operands = 0 : i64, tpu.core_type = #tpu.core_type<tc>} {
    %c0 = arith.constant 0 : index
    %c0_0 = arith.constant 0 : index
    %0 = memref.load %arg0[%c0, %c0_0] : memref<1x1xf32, #tpu.memory_space<smem>>
    %c128 = arith.constant 128 : index
    %c0_1 = arith.constant 0 : index
    %1 = vector.load %arg1[%c128, %c0_1] : memref<140x128xf32, #tpu.memory_space<vmem>>, vector<1x128xf32>
    %c129 = arith.constant 129 : index
    %c0_2 = arith.constant 0 : index
    %2 = vector.load %arg1[%c129, %c0_2] : memref<140x128xf32, #tpu.memory_space<vmem>>, vector<1x128xf32>
    %c130 = arith.constant 130 : index
    %c0_3 = arith.constant 0 : index
    %3 = vector.load %arg1[%c130, %c0_3] : memref<140x128xf32, #tpu.memory_space<vmem>>, vector<1x128xf32>
    %4 = vector.broadcast %0 : f32 to vector<1x128xf32>
    %5 = arith.mulf %4, %1 : vector<1x128xf32>
    %6 = arith.addf %5, %2 : vector<1x128xf32>
    %cst = arith.constant 0.000000e+00 : f32
    %7 = vector.broadcast %cst : f32 to vector<1x128xf32>
    %8 = arith.maximumf %6, %7 : vector<1x128xf32>
    %c0_4 = arith.constant 0 : index
    %c0_5 = arith.constant 0 : index
    %9 = vector.load %arg1[%c0_4, %c0_5] : memref<140x128xf32, #tpu.memory_space<vmem>>, vector<128x128xf32>
    %cst_6 = arith.constant dense<0.000000e+00> : vector<1x128xf32>
    %10 = tpu.matmul %8, %9, %cst_6 {dimension_numbers = #tpu.dot_dimension_numbers<[1], [0], [0], [1], [0, 0, 1, 1], [], []>} : vector<1x128xf32>, vector<128x128xf32>, vector<1x128xf32> -> vector<1x128xf32>
    %11 = arith.addf %10, %3 : vector<1x128xf32>
    %cst_7 = arith.constant 0.000000e+00 : f32
    %12 = vector.broadcast %cst_7 : f32 to vector<1x128xf32>
    %13 = arith.maximumf %11, %12 : vector<1x128xf32>
    %c131 = arith.constant 131 : index
    %c0_8 = arith.constant 0 : index
    %14 = vector.load %arg1[%c131, %c0_8] : memref<140x128xf32, #tpu.memory_space<vmem>>, vector<8x128xf32>
    %cst_9 = arith.constant dense<0.000000e+00> : vector<1x8xf32>
    %15 = tpu.matmul %13, %14, %cst_9 {dimension_numbers = #tpu.dot_dimension_numbers<[1], [1], [0], [0], [0, 0, 1, 0], [], []>} : vector<1x128xf32>, vector<8x128xf32>, vector<1x8xf32> -> vector<1x8xf32>
    %c139 = arith.constant 139 : index
    %c0_10 = arith.constant 0 : index
    %16 = vector.load %arg1[%c139, %c0_10] : memref<140x128xf32, #tpu.memory_space<vmem>>, vector<1x8xf32>
    %17 = arith.addf %15, %16 : vector<1x8xf32>
    %c0_11 = arith.constant 0 : index
    %c0_12 = arith.constant 0 : index
    %18 = vector.load %arg2[%c0_11, %c0_12] : memref<1x8xf32, #tpu.memory_space<vmem>>, vector<1x8xf32>
    tpu.vector_store %arg2[%c0_11, %c0_12], %17 {strides = array<i32>} : memref<1x8xf32, #tpu.memory_space<vmem>>, vector<1x8xf32>,
    return
  }
}

</mosaic_0001>

<llo_original>
// kernel: policy_forward.1
$region0: #{policy_forward.1}
  #allocation0 [shape = 'u32[]', space=smem, size = 0x4, offset = 0x4, fixed_abs, tag = 'smem constant byte address 0x4 - core index']
  #allocation1 [shape = 'u32[144,128]{1,0:T(1,128)}', space=vmem, size = 0x12000, scoped, tag = 'internal scratch']
  #allocation2 [shape = 'f32[1,1]{1,0:T(1,128)S(6)}', space=smem, size = 0x200, scoped, tag = 'scoped memory for policy_forward.1']
  %s0 = inlined_call_operand.<no memory space> [shape: f32[1,1], index: 0, kind: input, shape index: {}]
  %s1 = inlined_call_operand.hbm [shape: f32[140,128], index: 1, kind: input, shape index: {}]
  %s2 = inlined_call_operand.vmem [shape: f32[1,8], index: 2, kind: output, shape index: {}]
  %s3 = sld [smem:[#allocation0]]
  $region22: #{policy_forward.1} parent=0
    _
  %s5 = ssub.s32 1, %s3
  %s6 = scalar_select 0, %s5, %s3
  %7 = sst [smem:[#allocation2]] %s0
  $region1: #{policy_forward.1} parent=0
    #allocation3 [shape = 'u8[73728]{0}', space=vmem, size = 0x12000, scoped, tag = 'input window, operand 1, single buffered']
    #allocation4 [shape = 's32[1]{0}', space=sflag, size = 0x4, scoped, tag = 'scoped memory for policy_forward.1']
    %8 = vsyncpa [#allocation4], 0
    // Predicated region
    $region2: #{policy_forward.1} parent=1 // pred_check
      _
    $region3: #{policy_forward.1} parent=1 // pred_check_branch
      %10 = sbr.rel (0) target = $region5
    $region4: #{policy_forward.1} parent=1 // pred_region
      _
    $region5: #{policy_forward.1} parent=1 // pred_fallthru
      _
    // Predicated region
    $region6: #{policy_forward.1} parent=1 // pred_check
      _
    $region7: #{policy_forward.1} parent=1 // pred_check_branch
      %12 = sbr.rel (0) target = $region9
    $region8: #{policy_forward.1} parent=1 // pred_region
      %s14 = ssub.s32 2304, 2304
      %15 = vsyncadd [#allocation4], %s14
      %s16 = sshll.u32 [#allocation3], 4
      %s17 = int_to_ptr.vmem [resolvable:$true] %s16
      %22 = dma.hbm_to_vmem [thread:$0]  %s1, 2304, %s17, [#allocation4], 128, 128, 8
    $region9: #{policy_forward.1} parent=1 // pred_fallthru
      _
    // Predicated region
    $region10: #{policy_forward.1} parent=1 // pred_check
      _
    $region11: #{policy_forward.1} parent=1 // pred_check_branch
      %24 = sbr.rel (0) target = $region13
    $region12: #{policy_forward.1} parent=1 // pred_region
      %25 = dma.done [#allocation4], 2304
    $region13: #{policy_forward.1} parent=1 // pred_fallthru
      _
    %s26 = sld [smem:[#allocation2]]
    %v27 = vld [vmem:[#allocation3 + $0x80] sm:$0x1]
    %v28 = vld [vmem:[#allocation3 + $0x81] sm:$0x1]
    %v29 = vld [vmem:[#allocation3 + $0x82] sm:$0x1]
    %v30 = vstv %s26
    %v31 = vmul.f32 %v30, %v27
    %v32 = vadd.f32 %v31, %v28
    %v33 = vmax.f32 %v32, 0.0
    %v34 = vld [vmem:[#allocation3] sm:$0xff]
    %v35 = vld [vmem:[#allocation3 + $0x8] sm:$0xff]
    %v36 = vld [vmem:[#allocation3 + $0x10] sm:$0xff]
    %v37 = vld [vmem:[#allocation3 + $0x18] sm:$0xff]
    %v38 = vld [vmem:[#allocation3 + $0x20] sm:$0xff]
    %v39 = vld [vmem:[#allocation3 + $0x28] sm:$0xff]
    %v40 = vld [vmem:[#allocation3 + $0x30] sm:$0xff]
    %v41 = vld [vmem:[#allocation3 + $0x38] sm:$0xff]
    %v42 = vld [vmem:[#allocation3 + $0x40] sm:$0xff]
    %v43 = vld [vmem:[#allocation3 + $0x48] sm:$0xff]
    %v44 = vld [vmem:[#allocation3 + $0x50] sm:$0xff]
    %v45 = vld [vmem:[#allocation3 + $0x58] sm:$0xff]
    %v46 = vld [vmem:[#allocation3 + $0x60] sm:$0xff]
    %v47 = vld [vmem:[#allocation3 + $0x68] sm:$0xff]
    %v48 = vld [vmem:[#allocation3 + $0x70] sm:$0xff]
    %v49 = vld [vmem:[#allocation3 + $0x78] sm:$0xff]
    %50 = vmatprep.subr.mxu0 0.0
    %51 = vmatpush1.msra.mxu0 %v49
    %52 = vmatprep.subr.mxu0 0.0
    %53 = vmatpush1.msra.mxu0 %v48
    %54 = vmatprep.subr.mxu0 0.0
    %55 = vmatpush1.msra.mxu0 %v47
    %56 = vmatprep.subr.mxu0 0.0
    %57 = vmatpush1.msra.mxu0 %v46
    %58 = vmatprep.subr.mxu0 0.0
    %59 = vmatpush1.msra.mxu0 %v45
    %60 = vmatprep.subr.mxu0 0.0
    %61 = vmatpush1.msra.mxu0 %v44
    %62 = vmatprep.subr.mxu0 0.0
    %63 = vmatpush1.msra.mxu0 %v43
    %64 = vmatprep.subr.mxu0 0.0
    %65 = vmatpush1.msra.mxu0 %v42
    %66 = vmatprep.subr.mxu0 0.0
    %67 = vmatpush1.msra.mxu0 %v41
    %68 = vmatprep.subr.mxu0 0.0
    %69 = vmatpush1.msra.mxu0 %v40
    %70 = vmatprep.subr.mxu0 0.0
    %71 = vmatpush1.msra.mxu0 %v39
    %72 = vmatprep.subr.mxu0 0.0
    %73 = vmatpush1.msra.mxu0 %v38
    %74 = vmatprep.subr.mxu0 0.0
    %75 = vmatpush1.msra.mxu0 %v37
    %76 = vmatprep.subr.mxu0 0.0
    %77 = vmatpush1.msra.mxu0 %v36
    %78 = vmatprep.subr.mxu0 0.0
    %79 = vmatpush1.msra.mxu0 %v35
    %80 = vmatprep.subr.mxu0 0.0
    %81 = vmatpush1.msra.mxu0 %v34
    %82 = vmatprep.subr.mxu0 0.0
    %83 = vmatpush2.msra.mxu0 0.0
    %84 = vmatprep.subr.mxu0 0.0
    %85 = vmatpush2.msra.mxu0 0.0
    %86 = vmatprep.subr.mxu0 0.0
    %87 = vmatpush2.msra.mxu0 0.0
    %88 = vmatprep.subr.mxu0 0.0
    %89 = vmatpush2.msra.mxu0 0.0
    %90 = vmatprep.subr.mxu0 0.0
    %91 = vmatpush2.msra.mxu0 0.0
    %92 = vmatprep.subr.mxu0 0.0
    %93 = vmatpush2.msra.mxu0 0.0
    %94 = vmatprep.subr.mxu0 0.0
    %95 = vmatpush2.msra.mxu0 0.0
    %96 = vmatprep.subr.mxu0 0.0
    %97 = vmatpush2.msra.mxu0 0.0
    %98 = vmatprep.subr.mxu0 0.0
    %99 = vmatpush2.msra.mxu0 0.0
    %100 = vmatprep.subr.mxu0 0.0
    %101 = vmatpush2.msra.mxu0 0.0
    %102 = vmatprep.subr.mxu0 0.0
    %103 = vmatpush2.msra.mxu0 0.0
    %104 = vmatprep.subr.mxu0 0.0
    %105 = vmatpush2.msra.mxu0 0.0
    %106 = vmatprep.subr.mxu0 0.0
    %107 = vmatpush2.msra.mxu0 0.0
    %108 = vmatprep.subr.mxu0 0.0
    %109 = vmatpush2.msra.mxu0 0.0
    %110 = vmatprep.subr.mxu0 0.0
    %111 = vmatpush2.msra.mxu0 0.0
    %112 = vmatprep.subr.mxu0 0.0
    %113 = vmatpush2.msra.mxu0 0.0
    %114 = vmatprep.mubr.f32.mxu0 0.0
    %115 = vmatmul.mubr.f32.gmra.mxu0 %v33
    %v116 = vpop.f32.mrf.mxu0
    %v117 = vadd.f32 %v29, %v116
    %v118 = vpop.f32.mrf.mxu0
    %119 = vdwg.mxu0
    %v120 = vmax.f32 %v117, 0.0
    %v121 = vld [vmem:[#allocation3 + $0x83] sm:$0xff]
    %v122 = vld [vmem:[#allocation3 + $0x8b] sm:$0x1]
    %123 = vmatprep.subr.mxu0 0.0
    %124 = vmatpush1.xpose.msra.mxu0 0.0
    %125 = vmatprep.subr.mxu0 0.0
    %126 = vmatpush1.xpose.msra.mxu0 0.0
    %127 = vmatprep.subr.mxu0 0.0
    %128 = vmatpush1.xpose.msra.mxu0 0.0
    %129 = vmatprep.subr.mxu0 0.0
    %130 = vmatpush1.xpose.msra.mxu0 0.0
    %131 = vmatprep.subr.mxu0 0.0
    %132 = vmatpush1.xpose.msra.mxu0 0.0
    %133 = vmatprep.subr.mxu0 0.0
    %134 = vmatpush1.xpose.msra.mxu0 0.0
    %135 = vmatprep.subr.mxu0 0.0
    %136 = vmatpush1.xpose.msra.mxu0 0.0
    %137 = vmatprep.subr.mxu0 0.0
    %138 = vmatpush1.xpose.msra.mxu0 0.0
    %139 = vmatprep.subr.mxu0 0.0
    %140 = vmatpush1.xpose.msra.mxu0 0.0
    %141 = vmatprep.subr.mxu0 0.0
    %142 = vmatpush1.xpose.msra.mxu0 0.0
    %143 = vmatprep.subr.mxu0 0.0
    %144 = vmatpush1.xpose.msra.mxu0 0.0
    %145 = vmatprep.subr.mxu0 0.0
    %146 = vmatpush1.xpose.msra.mxu0 0.0
    %147 = vmatprep.subr.mxu0 0.0
    %148 = vmatpush1.xpose.msra.mxu0 0.0
    %149 = vmatprep.subr.mxu0 0.0
    %150 = vmatpush1.xpose.msra.mxu0 0.0
    %151 = vmatprep.subr.mxu0 0.0
    %152 = vmatpush1.xpose.msra.mxu0 0.0
    %153 = vmatprep.subr.mxu0 0.0
    %154 = vmatpush1.xpose.msra.mxu0 %v121
    %155 = vmatprep.subr.mxu0 0.0
    %156 = vmatpush2.xpose.msra.mxu0 0.0
    %157 = vmatprep.subr.mxu0 0.0
    %158 = vmatpush2.xpose.msra.mxu0 0.0
    %159 = vmatprep.subr.mxu0 0.0
    %160 = vmatpush2.xpose.msra.mxu0 0.0
    %161 = vmatprep.subr.mxu0 0.0
    %162 = vmatpush2.xpose.msra.mxu0 0.0
    %163 = vmatprep.subr.mxu0 0.0
    %164 = vmatpush2.xpose.msra.mxu0 0.0
    %165 = vmatprep.subr.mxu0 0.0
    %166 = vmatpush2.xpose.msra.mxu0 0.0
    %167 = vmatprep.subr.mxu0 0.0
    %168 = vmatpush2.xpose.msra.mxu0 0.0
    %169 = vmatprep.subr.mxu0 0.0
    %170 = vmatpush2.xpose.msra.mxu0 0.0
    %171 = vmatprep.subr.mxu0 0.0
    %172 = vmatpush2.xpose.msra.mxu0 0.0
    %173 = vmatprep.subr.mxu0 0.0
    %174 = vmatpush2.xpose.msra.mxu0 0.0
    %175 = vmatprep.subr.mxu0 0.0
    %176 = vmatpush2.xpose.msra.mxu0 0.0
    %177 = vmatprep.subr.mxu0 0.0
    %178 = vmatpush2.xpose.msra.mxu0 0.0
    %179 = vmatprep.subr.mxu0 0.0
    %180 = vmatpush2.xpose.msra.mxu0 0.0
    %181 = vmatprep.subr.mxu0 0.0
    %182 = vmatpush2.xpose.msra.mxu0 0.0
    %183 = vmatprep.subr.mxu0 0.0
    %184 = vmatpush2.xpose.msra.mxu0 0.0
    %185 = vmatprep.subr.mxu0 0.0
    %186 = vmatpush2.xpose.msra.mxu0 0.0
    %187 = vmatprep.mubr.f32.mxu0 0.0
    %188 = vmatmul.mubr.f32.gmra.mxu0 %v120
    %v189 = vpop.f32.mrf.mxu0
    %v190 = vadd.f32 %v122, %v189
    %v191 = vpop.f32.mrf.mxu0
    %192 = vdwg.mxu0
    %vm193 = vcmask 57344
    %194 = vst.msk [vmem:[%s2] sm:$0x1] %vm193, %v190
    // Predicated region
    $region14: #{policy_forward.1} parent=1 // pred_check
      _
    $region15: #{policy_forward.1} parent=1 // pred_check_branch
      %196 = sbr.rel (0) target = $region17
    $region16: #{policy_forward.1} parent=1 // pred_region
      _
    $region17: #{policy_forward.1} parent=1 // pred_fallthru
      _
    // Predicated region
    $region18: #{policy_forward.1} parent=1 // pred_check
      _
    $region19: #{policy_forward.1} parent=1 // pred_check_branch
      %198 = sbr.rel (0) target = $region21
    $region20: #{policy_forward.1} parent=1 // pred_region
      _
    $region21: #{policy_forward.1} parent=1 // pred_fallthru
      _
    %199 = vsyncpa [#allocation4], 1

</llo_original>
